<compile_context>
chip_gen: v5e
topology: v5e:2x2
jax: 0.10.0
libtpu: 0.0.40
codegen_flags: <defaults>
</compile_context>

<pallas_src>
import functools

import jax
import jax.numpy as jnp
from jax import lax
from jax.experimental import pallas as pl
from jax.experimental.pallas import tpu as pltpu

WEIGHT_BITS = 8      # self.weight_bits (non-trainable param = 8)
ACT_BITS = 8         # quantize_Q_d_8b / clamp_C_hw_8b
OUTPUT_SHIFT = 0.0   # self.output_shift (non-trainable param = 0)


def ai85_conv_kernel(x_ref, w_ref, b_ref, o_ref, *, n_kh, n_kw, wp):
    """Fused ai85_base forward for one image (transposed, shift-and-accumulate conv).

    x_ref : (Cin, Lp)          flattened zero-padded image, Lp = Hp * Wp
    w_ref : (KH*KW, Cout, Cin) pre-quantized per-tap weight matrices
    b_ref : (Cout, 1)          pre-quantized bias
    o_ref : (Cout, L)          output, L = Ho * Wp (columns >= Wo are garbage,
                               dropped by the wrapper)
    """
    cout, l = o_ref.shape
    acc = jnp.zeros((cout, l), jnp.float32)
    # KH*KW shifted matmuls accumulated in registers (3 f32 vregs for this size).
    for i in range(n_kh):
        for j in range(n_kw):
            d = i * wp + j                              # static lane offset of this tap
            xs = x_ref[:, pl.ds(d, l)]                  # (Cin, L)
            acc = acc + jnp.dot(w_ref[i * n_kw + j], xs,
                                preferred_element_type=jnp.float32)
    acc = acc + b_ref[...]                              # (Cout, 1) broadcast over lanes
    if OUTPUT_SHIFT != 0.0:                             # specialized away (shift == 0)
        acc = acc * (2.0 ** OUTPUT_SHIFT)
    acc = jnp.maximum(acc, 0.0)                         # activation = ReLU
    down_scale = 2.0 ** (ACT_BITS - 1)
    q = jnp.floor(acc * (1.0 / down_scale) + 0.5)       # quantize_Q_d_8b
    o_ref[...] = jnp.minimum(q, down_scale - 1.0)       # clamp_C_hw_8b (q >= 0 already)


@functools.partial(jax.jit, static_argnames=("padding",))
def ai85_conv2d_relu(x, weight, bias, *, padding=1):
    """ai85_base.forward for op=Conv2d(3x3, stride=1), act=ReLU, wide=False.

    x      : (N, Cin, H, W)       NCHW, float32
    weight : (Cout, Cin, KH, KW)  PyTorch OIHW layout, float32
    bias   : (Cout,)
    returns: (N, Cout, Ho, Wo)    float32, integer-valued in [0, 127]
    """
    n, cin, h, w = x.shape
    cout, _, kh, kw = weight.shape

    ho = h + 2 * padding - kh + 1
    wo = w + 2 * padding - kw + 1
    wp = w + 2 * padding                      # padded row stride (flat trick)
    extra = 1 if kw > 1 else 0                # one extra zero row so the last tap
    hp = h + 2 * padding + extra              # slice never reads past the block
    lp = hp * wp
    l = ho * wp

    # Zero-pad spatially once (single small copy), flatten spatial dims (free reshape).
    xp = jnp.pad(x, ((0, 0), (0, 0), (padding, padding + extra), (padding, padding)))
    xf = xp.reshape(n, cin, lp)

    # Loop-invariant parameter quantization hoisted out of the kernel.
    up_scale = 2.0 ** (WEIGHT_BITS - 1)
    w_q = jnp.floor(weight * up_scale + 0.5)                       # (Cout, Cin, KH, KW)
    w_taps = w_q.transpose(2, 3, 0, 1).reshape(kh * kw, cout, cin)  # (KH*KW, Cout, Cin)
    b_q = jnp.floor(bias * up_scale + 0.5).reshape(cout, 1)

    kernel = functools.partial(ai85_conv_kernel, n_kh=kh, n_kw=kw, wp=wp)

    out_flat = pl.pallas_call(
        kernel,
        out_shape=jax.ShapeDtypeStruct((n, cout, l), jnp.float32),
        grid_spec=pltpu.PrefetchScalarGridSpec(
            num_scalar_prefetch=0,
            grid=(n,),
            in_specs=[
                pl.BlockSpec((None, cin, lp), lambda i: (i, 0, 0)),      # one image
                pl.BlockSpec((kh * kw, cout, cin), lambda i: (0, 0, 0)),  # resident W
                pl.BlockSpec((cout, 1), lambda i: (0, 0)),                # resident b
            ],
            out_specs=pl.BlockSpec((None, cout, l), lambda i: (i, 0, 0)),
        ),
        compiler_params=pltpu.CompilerParams(
            dimension_semantics=("parallel",)),   # batch shards across TCs on v7x
    )(xf, w_taps, b_q)

    # Drop the (kw-1) garbage columns per row introduced by the flat-shift trick.
    out = out_flat.reshape(n, cout, ho, wp)[:, :, :, :wo]
    return out


def _reference(x, weight, bias, padding):
    """Pure-JAX reference of the same forward semantics (for sanity check)."""
    up = 2.0 ** (WEIGHT_BITS - 1)
    w_q = jnp.floor(weight * up + 0.5)
    b_q = jnp.floor(bias * up + 0.5)
    y = lax.conv_general_dilated(
        x, w_q, (1, 1), [(padding, padding), (padding, padding)],
        dimension_numbers=("NCHW", "OIHW", "NCHW"))
    y = y + b_q[None, :, None, None]
    y = y * (2.0 ** OUTPUT_SHIFT)
    y = jnp.maximum(y, 0.0)
    y = jnp.floor(y / (2.0 ** (ACT_BITS - 1)) + 0.5)
    return jnp.clip(y, -128.0, 127.0)


if __name__ == "__main__":
    # Small shapes consistent with a Conv2d(4, 8, 3, stride=1, padding=1) layer.
    N, CIN, H, W = 2, 4, 16, 16
    COUT, KH, KW = 8, 3, 3
    PADDING = 1

    key = jax.random.PRNGKey(0)
    kx, kw_, kb = jax.random.split(key, 3)
    x = jax.random.normal(kx, (N, CIN, H, W), dtype=jnp.float32)
    # Deterministic synthetic params in the usual pre-quantization range (-0.5, 0.5).
    weight = jax.random.uniform(kw_, (COUT, CIN, KH, KW), jnp.float32, -0.5, 0.5)
    bias = jax.random.uniform(kb, (COUT,), jnp.float32, -0.5, 0.5)

    out = ai85_conv2d_relu(x, weight, bias, padding=PADDING)
    out = jax.block_until_ready(out)

    ref = _reference(x, weight, bias, PADDING)
    # Allow at most one quantization level of disagreement (MXU vs XLA-conv float
    # accumulation order can tip floor() at exact boundaries).
    max_diff = float(jnp.max(jnp.abs(out - ref)))
    assert out.shape == (N, COUT, H, W), out.shape
    assert max_diff <= 1.0, f"mismatch vs reference: {max_diff}"

    print("KERNEL_OK")
</pallas_src>

<mosaic_0001>
module attributes {stable_mosaic.version = 11 : i64} {
  func.func @ai85_conv_kernel(%arg0: i32, %arg1: memref<1x4x342xf32, #tpu.memory_space<vmem>>, %arg2: memref<9x8x4xf32, #tpu.memory_space<vmem>>, %arg3: memref<8x1xf32, #tpu.memory_space<vmem>>, %arg4: memref<1x8x288xf32, #tpu.memory_space<vmem>>) attributes {dimension_semantics = [#tpu.dimension_semantics<parallel>], iteration_bounds = array<i64: 2>, scalar_prefetch = 0 : i64, scratch_operands = 0 : i64, tpu.core_type = #tpu.core_type<tc>, window_params = [{transform_indices = @transform_0, window_bounds = array<i64: 1, 4, 342>}, {pipeline_mode = #tpu.pipeline_mode<synchronous>, transform_indices = @transform_1, window_bounds = array<i64: 9, 8, 4>}, {pipeline_mode = #tpu.pipeline_mode<synchronous>, transform_indices = @transform_2, window_bounds = array<i64: 8, 1>}, {transform_indices = @transform_3, window_bounds = array<i64: 1, 8, 288>}]} {
    %cst = arith.constant 0.000000e+00 : f32
    %0 = vector.broadcast %cst : f32 to vector<8x288xf32>
    %c0 = arith.constant 0 : index
    %c0_0 = arith.constant 0 : index
    %c0_1 = arith.constant 0 : index
    %1 = vector.load %arg1[%c0, %c0_0, %c0_1] : memref<1x4x342xf32, #tpu.memory_space<vmem>>, vector<1x4x288xf32>
    %2 = vector.shape_cast %1 : vector<1x4x288xf32> to vector<4x288xf32>
    %c0_2 = arith.constant 0 : index
    %c0_3 = arith.constant 0 : index
    %c0_4 = arith.constant 0 : index
    %3 = vector.load %arg2[%c0_2, %c0_3, %c0_4] : memref<9x8x4xf32, #tpu.memory_space<vmem>>, vector<1x8x4xf32>
    %4 = vector.shape_cast %3 : vector<1x8x4xf32> to vector<8x4xf32>
    %cst_5 = arith.constant dense<0.000000e+00> : vector<8x288xf32>
    %5 = tpu.matmul %4, %2, %cst_5 {dimension_numbers = #tpu.dot_dimension_numbers<[1], [0], [0], [1], [0, 0, 1, 1], [], []>} : vector<8x4xf32>, vector<4x288xf32>, vector<8x288xf32> -> vector<8x288xf32>
    %6 = arith.addf %0, %5 : vector<8x288xf32>
    %c0_6 = arith.constant 0 : index
    %c0_7 = arith.constant 0 : index
    %c1 = arith.constant 1 : index
    %7 = vector.load %arg1[%c0_6, %c0_7, %c1] : memref<1x4x342xf32, #tpu.memory_space<vmem>>, vector<1x4x288xf32>
    %8 = vector.shape_cast %7 : vector<1x4x288xf32> to vector<4x288xf32>
    %c1_8 = arith.constant 1 : index
    %c0_9 = arith.constant 0 : index
    %c0_10 = arith.constant 0 : index
    %9 = vector.load %arg2[%c1_8, %c0_9, %c0_10] : memref<9x8x4xf32, #tpu.memory_space<vmem>>, vector<1x8x4xf32>
    %10 = vector.shape_cast %9 : vector<1x8x4xf32> to vector<8x4xf32>
    %cst_11 = arith.constant dense<0.000000e+00> : vector<8x288xf32>
    %11 = tpu.matmul %10, %8, %cst_11 {dimension_numbers = #tpu.dot_dimension_numbers<[1], [0], [0], [1], [0, 0, 1, 1], [], []>} : vector<8x4xf32>, vector<4x288xf32>, vector<8x288xf32> -> vector<8x288xf32>
    %12 = arith.addf %6, %11 : vector<8x288xf32>
    %c0_12 = arith.constant 0 : index
    %c0_13 = arith.constant 0 : index
    %c2 = arith.constant 2 : index
    %13 = vector.load %arg1[%c0_12, %c0_13, %c2] : memref<1x4x342xf32, #tpu.memory_space<vmem>>, vector<1x4x288xf32>
    %14 = vector.shape_cast %13 : vector<1x4x288xf32> to vector<4x288xf32>
    %c2_14 = arith.constant 2 : index
    %c0_15 = arith.constant 0 : index
    %c0_16 = arith.constant 0 : index
    %15 = vector.load %arg2[%c2_14, %c0_15, %c0_16] : memref<9x8x4xf32, #tpu.memory_space<vmem>>, vector<1x8x4xf32>
    %16 = vector.shape_cast %15 : vector<1x8x4xf32> to vector<8x4xf32>
    %cst_17 = arith.constant dense<0.000000e+00> : vector<8x288xf32>
    %17 = tpu.matmul %16, %14, %cst_17 {dimension_numbers = #tpu.dot_dimension_numbers<[1], [0], [0], [1], [0, 0, 1, 1], [], []>} : vector<8x4xf32>, vector<4x288xf32>, vector<8x288xf32> -> vector<8x288xf32>
    %18 = arith.addf %12, %17 : vector<8x288xf32>
    %c0_18 = arith.constant 0 : index
    %c0_19 = arith.constant 0 : index
    %c18 = arith.constant 18 : index
    %19 = vector.load %arg1[%c0_18, %c0_19, %c18] : memref<1x4x342xf32, #tpu.memory_space<vmem>>, vector<1x4x288xf32>
    %20 = vector.shape_cast %19 : vector<1x4x288xf32> to vector<4x288xf32>
    %c3 = arith.constant 3 : index
    %c0_20 = arith.constant 0 : index
    %c0_21 = arith.constant 0 : index
    %21 = vector.load %arg2[%c3, %c0_20, %c0_21] : memref<9x8x4xf32, #tpu.memory_space<vmem>>, vector<1x8x4xf32>
    %22 = vector.shape_cast %21 : vector<1x8x4xf32> to vector<8x4xf32>
    %cst_22 = arith.constant dense<0.000000e+00> : vector<8x288xf32>
    %23 = tpu.matmul %22, %20, %cst_22 {dimension_numbers = #tpu.dot_dimension_numbers<[1], [0], [0], [1], [0, 0, 1, 1], [], []>} : vector<8x4xf32>, vector<4x288xf32>, vector<8x288xf32> -> vector<8x288xf32>
    %24 = arith.addf %18, %23 : vector<8x288xf32>
    %c0_23 = arith.constant 0 : index
    %c0_24 = arith.constant 0 : index
    %c19 = arith.constant 19 : index
    %25 = vector.load %arg1[%c0_23, %c0_24, %c19] : memref<1x4x342xf32, #tpu.memory_space<vmem>>, vector<1x4x288xf32>
    %26 = vector.shape_cast %25 : vector<1x4x288xf32> to vector<4x288xf32>
    %c4 = arith.constant 4 : index
    %c0_25 = arith.constant 0 : index
    %c0_26 = arith.constant 0 : index
    %27 = vector.load %arg2[%c4, %c0_25, %c0_26] : memref<9x8x4xf32, #tpu.memory_space<vmem>>, vector<1x8x4xf32>
    %28 = vector.shape_cast %27 : vector<1x8x4xf32> to vector<8x4xf32>
    %cst_27 = arith.constant dense<0.000000e+00> : vector<8x288xf32>
    %29 = tpu.matmul %28, %26, %cst_27 {dimension_numbers = #tpu.dot_dimension_numbers<[1], [0], [0], [1], [0, 0, 1, 1], [], []>} : vector<8x4xf32>, vector<4x288xf32>, vector<8x288xf32> -> vector<8x288xf32>
    %30 = arith.addf %24, %29 : vector<8x288xf32>
    %c0_28 = arith.constant 0 : index
    %c0_29 = arith.constant 0 : index
    %c20 = arith.constant 20 : index
    %31 = vector.load %arg1[%c0_28, %c0_29, %c20] : memref<1x4x342xf32, #tpu.memory_space<vmem>>, vector<1x4x288xf32>
    %32 = vector.shape_cast %31 : vector<1x4x288xf32> to vector<4x288xf32>
    %c5 = arith.constant 5 : index
    %c0_30 = arith.constant 0 : index
    %c0_31 = arith.constant 0 : index
    %33 = vector.load %arg2[%c5, %c0_30, %c0_31] : memref<9x8x4xf32, #tpu.memory_space<vmem>>, vector<1x8x4xf32>
    %34 = vector.shape_cast %33 : vector<1x8x4xf32> to vector<8x4xf32>
    %cst_32 = arith.constant dense<0.000000e+00> : vector<8x288xf32>
    %35 = tpu.matmul %34, %32, %cst_32 {dimension_numbers = #tpu.dot_dimension_numbers<[1], [0], [0], [1], [0, 0, 1, 1], [], []>} : vector<8x4xf32>, vector<4x288xf32>, vector<8x288xf32> -> vector<8x288xf32>
    %36 = arith.addf %30, %35 : vector<8x288xf32>
    %c0_33 = arith.constant 0 : index
    %c0_34 = arith.constant 0 : index
    %c36 = arith.constant 36 : index
    %37 = vector.load %arg1[%c0_33, %c0_34, %c36] : memref<1x4x342xf32, #tpu.memory_space<vmem>>, vector<1x4x288xf32>
    %38 = vector.shape_cast %37 : vector<1x4x288xf32> to vector<4x288xf32>
    %c6 = arith.constant 6 : index
    %c0_35 = arith.constant 0 : index
    %c0_36 = arith.constant 0 : index
    %39 = vector.load %arg2[%c6, %c0_35, %c0_36] : memref<9x8x4xf32, #tpu.memory_space<vmem>>, vector<1x8x4xf32>
    %40 = vector.shape_cast %39 : vector<1x8x4xf32> to vector<8x4xf32>
    %cst_37 = arith.constant dense<0.000000e+00> : vector<8x288xf32>
    %41 = tpu.matmul %40, %38, %cst_37 {dimension_numbers = #tpu.dot_dimension_numbers<[1], [0], [0], [1], [0, 0, 1, 1], [], []>} : vector<8x4xf32>, vector<4x288xf32>, vector<8x288xf32> -> vector<8x288xf32>
    %42 = arith.addf %36, %41 : vector<8x288xf32>
    %c0_38 = arith.constant 0 : index
    %c0_39 = arith.constant 0 : index
    %c37 = arith.constant 37 : index
    %43 = vector.load %arg1[%c0_38, %c0_39, %c37] : memref<1x4x342xf32, #tpu.memory_space<vmem>>, vector<1x4x288xf32>
    %44 = vector.shape_cast %43 : vector<1x4x288xf32> to vector<4x288xf32>
    %c7 = arith.constant 7 : index
    %c0_40 = arith.constant 0 : index
    %c0_41 = arith.constant 0 : index
    %45 = vector.load %arg2[%c7, %c0_40, %c0_41] : memref<9x8x4xf32, #tpu.memory_space<vmem>>, vector<1x8x4xf32>
    %46 = vector.shape_cast %45 : vector<1x8x4xf32> to vector<8x4xf32>
    %cst_42 = arith.constant dense<0.000000e+00> : vector<8x288xf32>
    %47 = tpu.matmul %46, %44, %cst_42 {dimension_numbers = #tpu.dot_dimension_numbers<[1], [0], [0], [1], [0, 0, 1, 1], [], []>} : vector<8x4xf32>, vector<4x288xf32>, vector<8x288xf32> -> vector<8x288xf32>
    %48 = arith.addf %42, %47 : vector<8x288xf32>
    %c0_43 = arith.constant 0 : index
    %c0_44 = arith.constant 0 : index
    %c38 = arith.constant 38 : index
    %49 = vector.load %arg1[%c0_43, %c0_44, %c38] : memref<1x4x342xf32, #tpu.memory_space<vmem>>, vector<1x4x288xf32>
    %50 = vector.shape_cast %49 : vector<1x4x288xf32> to vector<4x288xf32>
    %c8 = arith.constant 8 : index
    %c0_45 = arith.constant 0 : index
    %c0_46 = arith.constant 0 : index
    %51 = vector.load %arg2[%c8, %c0_45, %c0_46] : memref<9x8x4xf32, #tpu.memory_space<vmem>>, vector<1x8x4xf32>
    %52 = vector.shape_cast %51 : vector<1x8x4xf32> to vector<8x4xf32>
    %cst_47 = arith.constant dense<0.000000e+00> : vector<8x288xf32>
    %53 = tpu.matmul %52, %50, %cst_47 {dimension_numbers = #tpu.dot_dimension_numbers<[1], [0], [0], [1], [0, 0, 1, 1], [], []>} : vector<8x4xf32>, vector<4x288xf32>, vector<8x288xf32> -> vector<8x288xf32>
    %54 = arith.addf %48, %53 : vector<8x288xf32>
    %c0_48 = arith.constant 0 : index
    %c0_49 = arith.constant 0 : index
    %55 = vector.load %arg3[%c0_48, %c0_49] : memref<8x1xf32, #tpu.memory_space<vmem>>, vector<8x1xf32>
    %56 = vector.broadcast %55 : vector<8x1xf32> to vector<8x288xf32>
    %57 = arith.addf %54, %56 : vector<8x288xf32>
    %cst_50 = arith.constant 0.000000e+00 : f32
    %58 = vector.broadcast %cst_50 : f32 to vector<8x288xf32>
    %59 = arith.maximumf %57, %58 : vector<8x288xf32>
    %cst_51 = arith.constant 7.812500e-03 : f32
    %60 = vector.broadcast %cst_51 : f32 to vector<8x288xf32>
    %61 = arith.mulf %59, %60 : vector<8x288xf32>
    %cst_52 = arith.constant 5.000000e-01 : f32
    %62 = vector.broadcast %cst_52 : f32 to vector<8x288xf32>
    %63 = arith.addf %61, %62 : vector<8x288xf32>
    %64 = math.floor %63 : vector<8x288xf32>
    %cst_53 = arith.constant 1.270000e+02 : f32
    %65 = vector.broadcast %cst_53 : f32 to vector<8x288xf32>
    %66 = arith.minimumf %64, %65 : vector<8x288xf32>
    %c0_54 = arith.constant 0 : index
    %c0_55 = arith.constant 0 : index
    %c0_56 = arith.constant 0 : index
    %67 = vector.load %arg4[%c0_54, %c0_55, %c0_56] : memref<1x8x288xf32, #tpu.memory_space<vmem>>, vector<1x8x288xf32>
    %68 = vector.shape_cast %67 : vector<1x8x288xf32> to vector<8x288xf32>
    %69 = vector.shape_cast %66 : vector<8x288xf32> to vector<1x8x288xf32>
    tpu.vector_store %arg4[%c0_54, %c0_55, %c0_56], %69 {strides = array<i32>} : memref<1x8x288xf32, #tpu.memory_space<vmem>>, vector<1x8x288xf32>,
    return
  }
  func.func @transform_0(%arg0: i32) -> (i32, i32, i32) {
    %c0_i32 = arith.constant 0 : i32
    %c0_i32_0 = arith.constant 0 : i32
    %c0_i32_1 = arith.constant 0 : i32
    return %arg0, %c0_i32, %c0_i32_0 : i32, i32, i32
  }
  func.func @transform_1(%arg0: i32) -> (i32, i32, i32) {
    %c0_i32 = arith.constant 0 : i32
    %c0_i32_0 = arith.constant 0 : i32
    %c0_i32_1 = arith.constant 0 : i32
    %c0_i32_2 = arith.constant 0 : i32
    return %c0_i32, %c0_i32_0, %c0_i32_1 : i32, i32, i32
  }
  func.func @transform_2(%arg0: i32) -> (i32, i32) {
    %c0_i32 = arith.constant 0 : i32
    %c0_i32_0 = arith.constant 0 : i32
    %c0_i32_1 = arith.constant 0 : i32
    return %c0_i32, %c0_i32_0 : i32, i32
  }
  func.func @transform_3(%arg0: i32) -> (i32, i32, i32) {
    %c0_i32 = arith.constant 0 : i32
    %c0_i32_0 = arith.constant 0 : i32
    %c0_i32_1 = arith.constant 0 : i32
    return %arg0, %c0_i32, %c0_i32_0 : i32, i32, i32
  }
}

</mosaic_0001>

<llo_original>
// kernel: ai85_conv2d_relu.1
$region0: #{ai85_conv2d_relu.1}
  #allocation0 [shape = 'u32[]', space=smem, size = 0x4, offset = 0x4, fixed_abs, tag = 'smem constant byte address 0x4 - core index']
  #allocation1 [shape = 'u32[72,128]{1,0:T(1,128)}', space=vmem, size = 0x9000, scoped, tag = 'internal scratch']
  %s0 = inlined_call_operand.vmem [shape: f32[2,4,342], index: 0, kind: input, shape index: {}]
  %s1 = inlined_call_operand.vmem [shape: f32[9,8,4], index: 1, kind: input, shape index: {}]
  %s2 = inlined_call_operand.vmem [shape: f32[8,1], index: 2, kind: input, shape index: {}]
  %s3 = inlined_call_operand.vmem [shape: f32[2,8,288], index: 3, kind: output, shape index: {}]
  %s4 = sld [smem:[#allocation0]]
  $region45: #{ai85_conv2d_relu.1} parent=0
    _
  %s6 = ssub.s32 1, %s4
  %s7 = scalar_select 0, %s6, %s4
  loop: start=0, step=1, limit=4
  $region2: #{ai85_conv2d_relu.1} parent=0 // loop_pre_header
    _
  $region3: #{ai85_conv2d_relu.1} parent=0 // loop_header
    %s9 = sphi 0, %s13
    %p10 = scmp.ge.s32.totalorder %s9, 4
    %s19 = sphi 0, %s21
    %s22 = sphi 0, %s19
    %s23 = sphi 0, %s22
    %s39 = sphi 0, %s23
    %s43 = sphi 0, %s43
    %s45 = sphi 0, %s43
    %s46 = sphi 0, %s45
    %s60 = sphi 0, %s46
    %s64 = sphi 0, %s64
    %s66 = sphi 0, %s64
    %s67 = sphi 0, %s66
    %s81 = sphi 0, %s67
    %s87 = sphi 0, %s89
    %s90 = sphi 0, %s87
    %s91 = sphi 0, %s90
    %s107 = sphi 0, %s91
  $region4: #{ai85_conv2d_relu.1} parent=0 // loop_header_branch
    %12 = sbr.rel (%p10) target = $region8
  $region5: #{ai85_conv2d_relu.1} parent=0 // loop_body
    %s14 = ssub.s32 %s9, 1
    %s15 = ssub.s32 %s9, 2
    %s16 = sadd.s32 %s9, 1
    %s17 = ssub.s32 %s9, %s16
    %p18 = scmp.eq.s32.totalorder %s17, 0
    %s20 = sadd.s32 %s19, 1
    %s21 = scalar_select %p18, %s19, %s20
    %p24 = pneg %p18
    %p25 = scmp.eq.s32.totalorder %s9, 1
    %p26 = por %p24, %p25
    %p27 = scmp.ne.s32.totalorder %s19, %s22
    %p28 = scmp.eq.s32.totalorder %s9, 0
    %p29 = por %p27, %p28
    %p30 = scmp.ne.s32.totalorder %s19, %s22
    %p31 = scmp.eq.s32.totalorder %s14, 1
    %p32 = por %p30, %p31
    %p33 = scmp.ne.s32.totalorder %s22, %s23
    %p34 = scmp.eq.s32.totalorder %s14, 0
    %p35 = por %p33, %p34
    %p36 = scmp.ne.s32.totalorder %s22, %s23
    %p37 = scmp.eq.s32.totalorder %s15, 1
    %p38 = por %p36, %p37
    %p40 = scmp.ne.s32.totalorder %s23, %s39
    %p41 = scmp.eq.s32.totalorder %s15, 0
    %p42 = por %p40, %p41
    %s44 = sadd.s32 %s43, 1
    %p47 = scmp.eq.s32.totalorder %s9, 1
    %p48 = scmp.ne.s32.totalorder %s43, %s45
    %p49 = scmp.eq.s32.totalorder %s9, 0
    %p50 = por %p48, %p49
    %p51 = scmp.ne.s32.totalorder %s43, %s45
    %p52 = scmp.eq.s32.totalorder %s14, 1
    %p53 = por %p51, %p52
    %p54 = scmp.ne.s32.totalorder %s45, %s46
    %p55 = scmp.eq.s32.totalorder %s14, 0
    %p56 = por %p54, %p55
    %p57 = scmp.ne.s32.totalorder %s45, %s46
    %p58 = scmp.eq.s32.totalorder %s15, 1
    %p59 = por %p57, %p58
    %p61 = scmp.ne.s32.totalorder %s46, %s60
    %p62 = scmp.eq.s32.totalorder %s15, 0
    %p63 = por %p61, %p62
    %s65 = sadd.s32 %s64, 1
    %p68 = scmp.eq.s32.totalorder %s9, 1
    %p69 = scmp.ne.s32.totalorder %s64, %s66
    %p70 = scmp.eq.s32.totalorder %s9, 0
    %p71 = por %p69, %p70
    %p72 = scmp.ne.s32.totalorder %s64, %s66
    %p73 = scmp.eq.s32.totalorder %s14, 1
    %p74 = por %p72, %p73
    %p75 = scmp.ne.s32.totalorder %s66, %s67
    %p76 = scmp.eq.s32.totalorder %s14, 0
    %p77 = por %p75, %p76
    %p78 = scmp.ne.s32.totalorder %s66, %s67
    %p79 = scmp.eq.s32.totalorder %s15, 1
    %p80 = por %p78, %p79
    %p82 = scmp.ne.s32.totalorder %s67, %s81
    %p83 = scmp.eq.s32.totalorder %s15, 0
    %p84 = por %p82, %p83
    %s85 = ssub.s32 %s9, %s16
    %p86 = scmp.eq.s32.totalorder %s85, 0
    %s88 = sadd.s32 %s87, 1
    %s89 = scalar_select %p86, %s87, %s88
    %p92 = pneg %p86
    %p93 = scmp.eq.s32.totalorder %s9, 1
    %p94 = por %p92, %p93
    %p95 = scmp.ne.s32.totalorder %s87, %s90
    %p96 = scmp.eq.s32.totalorder %s9, 0
    %p97 = por %p95, %p96
    %p98 = scmp.ne.s32.totalorder %s87, %s90
    %p99 = scmp.eq.s32.totalorder %s14, 1
    %p100 = por %p98, %p99
    %p101 = scmp.ne.s32.totalorder %s90, %s91
    %p102 = scmp.eq.s32.totalorder %s14, 0
    %p103 = por %p101, %p102
    %p104 = scmp.ne.s32.totalorder %s90, %s91
    %p105 = scmp.eq.s32.totalorder %s15, 1
    %p106 = por %p104, %p105
    %p108 = scmp.ne.s32.totalorder %s91, %s107
    %p109 = scmp.eq.s32.totalorder %s15, 0
    %p110 = por %p108, %p109
    %p111 = scmp.le.s32.totalorder 1, %s9
    %p112 = scmp.lt.s32.totalorder %s9, 3
    %p113 = pnand %p111, %p112
    %p114 = pneg %p113
    // Predicated region
    $region9: #{ai85_conv2d_relu.1} parent=5 // pred_check
      _
    $region10: #{ai85_conv2d_relu.1} parent=5 // pred_check_branch
      %116 = sbr.rel (%p113) target = $region12
    $region11: #{ai85_conv2d_relu.1} parent=5 // pred_region
      %s117 = ssub.s32 %s9, 1
      // Predicated region
      $region13: #{ai85_conv2d_relu.1} parent=11 // pred_check
        %p118 = pneg %p56
      $region14: #{ai85_conv2d_relu.1} parent=11 // pred_check_branch
        %120 = sbr.rel (%p118) target = $region16
      $region15: #{ai85_conv2d_relu.1} parent=11 // pred_region
        _
      $region16: #{ai85_conv2d_relu.1} parent=11 // pred_fallthru
        _
      // Predicated region
      $region17: #{ai85_conv2d_relu.1} parent=11 // pred_check
        %p121 = pneg %p77
      $region18: #{ai85_conv2d_relu.1} parent=11 // pred_check_branch
        %123 = sbr.rel (%p121) target = $region20
      $region19: #{ai85_conv2d_relu.1} parent=11 // pred_region
        _
      $region20: #{ai85_conv2d_relu.1} parent=11 // pred_fallthru
        _
    $region12: #{ai85_conv2d_relu.1} parent=5 // pred_fallthru
      _
    %p124 = scmp.lt.s32.totalorder %s9, 2
    // Predicated region
    $region21: #{ai85_conv2d_relu.1} parent=5 // pred_check
      %p125 = pneg %p124
    $region22: #{ai85_conv2d_relu.1} parent=5 // pred_check_branch
      %127 = sbr.rel (%p125) target = $region24
    $region23: #{ai85_conv2d_relu.1} parent=5 // pred_region
      // Predicated region
      $region25: #{ai85_conv2d_relu.1} parent=23 // pred_check
        %p128 = pneg %p29
      $region26: #{ai85_conv2d_relu.1} parent=23 // pred_check_branch
        %130 = sbr.rel (%p128) target = $region28
      $region27: #{ai85_conv2d_relu.1} parent=23 // pred_region
        %p131 = scmp.lt.s32.totalorder %s9, 1
        %s132 = scalar_select %p131, %s9, 1
        %s133 = smul.addr %s132, 3
        %s134 = smul.addr %s133, 4
        %s135 = scalar_lea.vmem %s0, %s134
      $region28: #{ai85_conv2d_relu.1} parent=23 // pred_fallthru
        _
    $region24: #{ai85_conv2d_relu.1} parent=5 // pred_fallthru
      _
    %p136 = scmp.le.s32.totalorder 1, %s9
    %p137 = scmp.lt.s32.totalorder %s9, 3
    %p138 = pnand %p136, %p137
    %p139 = pneg %p138
    // Predicated region
    $region29: #{ai85_conv2d_relu.1} parent=5 // pred_check
      _
    $region30: #{ai85_conv2d_relu.1} parent=5 // pred_check_branch
      %141 = sbr.rel (%p138) target = $region32
    $region31: #{ai85_conv2d_relu.1} parent=5 // pred_region
      %s142 = ssub.s32 %s9, 1
      %p143 = scmp.lt.s32.totalorder %s14, 1
      %s144 = scalar_select %p143, %s14, 1
      %s145 = smul.addr %s144, 3
      %s146 = smul.addr %s145, 4
      %s147 = scalar_lea.vmem %s0, %s146
      %p148 = pneg %p35
      %p149 = pneg %p32
      %p150 = pneg %p56
      %p151 = pneg %p53
      %p152 = pneg %p77
      %p153 = pneg %p74
      %p154 = pneg %p103
      %p155 = pneg %p100
      %p156 = scmp.lt.s32.totalorder %s14, 1
      %s157 = scalar_select %p156, %s14, 1
      %s158 = smul.addr %s157, 3
      %s159 = smul.addr %s158, 8
      %s160 = scalar_lea.vmem %s3, %s159
      %p161 = scmp.lt.s32.totalorder %s14, 1
      %s162 = scalar_select %p161, %s14, 1
      %s163 = smul.addr %s162, 3
      %s164 = smul.addr %s163, 4
      %s165 = scalar_lea.vmem %s0, %s164
      %p166 = scmp.lt.s32.totalorder %s14, 1
      %s167 = scalar_select %p166, %s14, 1
      %s168 = smul.addr %s167, 3
      %s169 = smul.addr %s168, 8
      %s170 = scalar_lea.vmem %s3, %s169
      %v171 = vld [vmem:[%s165] sm:$0xff]
      %v172 = vld [vmem:[%s165 + $0x8] sm:$0xf]
      %v173 = vld [vmem:[%s1] sm:$0xff]
      %s174 = scalar_lea.vmem %s1, 8
      %v175 = vld [vmem:[%s174] sm:$0xff]
      %178 = vst [vmem:[#allocation1] ss:$2 sm:$0xff] %v171
      %s179 = scalar_lea.vmem [#allocation1], 16
      %180 = vst [vmem:[%s179] ss:$2 sm:$0xff] %v172
      %v181 = vld.sshfl [vmem:[#allocation1] sm:$0xff pattern:$0x75316420]
      %v182 = vld.sshfl [vmem:[#allocation1 + $0x8] sm:$0xff pattern:$0x75316420]
      %v183 = vld.sshfl [vmem:[#allocation1 + $0x10] sm:$0xff pattern:$0x75316420]
      %184 = vrot.lane.b32.xlu0 %v181, 127
      %v185 = vpop.permute.xlu0 %184
      %186 = vrot.lane.b32.xlu0 %v182, 127
      %v187 = vpop.permute.xlu0 %186
      %188 = vrot.lane.b32.xlu0 %v183, 127
      %v189 = vpop.permute.xlu0 %188
      %vm190 = vcmask 1039360
      %v191 = vsel %vm190, %v185, %v187
      %v192 = vsel %vm190, %v187, %v189
      %vm193 = vcmask 31744
      %v195 = vsel %vm193, %v175, 0
      %vm197 = vcmask 1043456
      %v198 = vsel %vm197, %v191, 0
      %v200 = vsel %vm197, %v192, 0
      %v202 = vsel %vm197, %v189, 0
      %204 = vmatpush.msra.mxu0 0.0
      %205 = vmatpush.msra.mxu0 0.0
      %206 = vmatpush.msra.mxu0 0.0
      %207 = vmatpush.msra.mxu0 0.0
      %208 = vmatpush.msra.mxu0 0.0
      %209 = vmatpush.msra.mxu0 0.0
      %210 = vmatpush.msra.mxu0 0.0
      %211 = vmatpush.msra.mxu0 0.0
      %212 = vmatpush.msra.mxu0 0.0
      %213 = vmatpush.msra.mxu0 0.0
      %214 = vmatpush.msra.mxu0 0.0
      %215 = vmatpush.msra.mxu0 0.0
      %216 = vmatpush.msra.mxu0 0.0
      %217 = vmatpush.msra.mxu0 0.0
      %218 = vmatpush.msra.mxu0 0.0
      %219 = vmatpush.msra.mxu0 %v198
      %220 = vmatmul.f32.gmra.mxu0 %v195
      %v221 = vpop.f32.mrf.mxu0
      %v222 = vadd.f32 0.0, %v221
      %223 = vdwg.mxu0
      %224 = vmatpush.msra.mxu0 0.0
      %225 = vmatpush.msra.mxu0 0.0
      %226 = vmatpush.msra.mxu0 0.0
      %227 = vmatpush.msra.mxu0 0.0
      %228 = vmatpush.msra.mxu0 0.0
      %229 = vmatpush.msra.mxu0 0.0
      %230 = vmatpush.msra.mxu0 0.0
      %231 = vmatpush.msra.mxu0 0.0
      %232 = vmatpush.msra.mxu0 0.0
      %233 = vmatpush.msra.mxu0 0.0
      %234 = vmatpush.msra.mxu0 0.0
      %235 = vmatpush.msra.mxu0 0.0
      %236 = vmatpush.msra.mxu0 0.0
      %237 = vmatpush.msra.mxu0 0.0
      %238 = vmatpush.msra.mxu0 0.0
      %239 = vmatpush.msra.mxu0 %v200
      %240 = vmatmul.f32.gmra.mxu0 %v195
      %v241 = vpop.f32.mrf.mxu0
      %v242 = vadd.f32 0.0, %v241
      %243 = vdwg.mxu0
      %244 = vmatpush.msra.mxu0 0.0
      %245 = vmatpush.msra.mxu0 0.0
      %246 = vmatpush.msra.mxu0 0.0
      %247 = vmatpush.msra.mxu0 0.0
      %248 = vmatpush.msra.mxu0 0.0
      %249 = vmatpush.msra.mxu0 0.0
      %250 = vmatpush.msra.mxu0 0.0
      %251 = vmatpush.msra.mxu0 0.0
      %252 = vmatpush.msra.mxu0 0.0
      %253 = vmatpush.msra.mxu0 0.0
      %254 = vmatpush.msra.mxu0 0.0
      %255 = vmatpush.msra.mxu0 0.0
      %256 = vmatpush.msra.mxu0 0.0
      %257 = vmatpush.msra.mxu0 0.0
      %258 = vmatpush.msra.mxu0 0.0
      %259 = vmatpush.msra.mxu0 %v202
      %260 = vmatmul.f32.gmra.mxu0 %v195
      %v261 = vpop.f32.mrf.mxu0
      %v262 = vadd.f32 0.0, %v261
      %263 = vdwg.mxu0
      %264 = vst [vmem:[#allocation1] ss:$2 sm:$0xff] %v171
      %s265 = scalar_lea.vmem [#allocation1], 16
      %266 = vst [vmem:[%s265] ss:$2 sm:$0xff] %v172
      %v267 = vld.sshfl [vmem:[#allocation1] sm:$0xff pattern:$0x75316420]
      %v268 = vld.sshfl [vmem:[#allocation1 + $0x8] sm:$0xff pattern:$0x75316420]
      %v269 = vld.sshfl [vmem:[#allocation1 + $0x10] sm:$0xff pattern:$0x75316420]
      %v271 = vsel %vm193, %v173, 0
      %v273 = vsel %vm197, %v267, 0
      %v275 = vsel %vm197, %v268, 0
      %v277 = vsel %vm197, %v269, 0
      %279 = vmatpush.msra.mxu0 0.0
      %280 = vmatpush.msra.mxu0 0.0
      %281 = vmatpush.msra.mxu0 0.0
      %282 = vmatpush.msra.mxu0 0.0
      %283 = vmatpush.msra.mxu0 0.0
      %284 = vmatpush.msra.mxu0 0.0
      %285 = vmatpush.msra.mxu0 0.0
      %286 = vmatpush.msra.mxu0 0.0
      %287 = vmatpush.msra.mxu0 0.0
      %288 = vmatpush.msra.mxu0 0.0
      %289 = vmatpush.msra.mxu0 0.0
      %290 = vmatpush.msra.mxu0 0.0
      %291 = vmatpush.msra.mxu0 0.0
      %292 = vmatpush.msra.mxu0 0.0
      %293 = vmatpush.msra.mxu0 0.0
      %294 = vmatpush.msra.mxu0 %v273
      %295 = vmatmul.f32.gmra.mxu0 %v271
      %v296 = vpop.f32.mrf.mxu0
      %v297 = vadd.f32 %v222, %v296
      %298 = vdwg.mxu0
      %299 = vmatpush.msra.mxu0 0.0
      %300 = vmatpush.msra.mxu0 0.0
      %301 = vmatpush.msra.mxu0 0.0
      %302 = vmatpush.msra.mxu0 0.0
      %303 = vmatpush.msra.mxu0 0.0
      %304 = vmatpush.msra.mxu0 0.0
      %305 = vmatpush.msra.mxu0 0.0
      %306 = vmatpush.msra.mxu0 0.0
      %307 = vmatpush.msra.mxu0 0.0
      %308 = vmatpush.msra.mxu0 0.0
      %309 = vmatpush.msra.mxu0 0.0
      %310 = vmatpush.msra.mxu0 0.0
      %311 = vmatpush.msra.mxu0 0.0
      %312 = vmatpush.msra.mxu0 0.0
      %313 = vmatpush.msra.mxu0 0.0
      %314 = vmatpush.msra.mxu0 %v275
      %315 = vmatmul.f32.gmra.mxu0 %v271
      %v316 = vpop.f32.mrf.mxu0
      %v317 = vadd.f32 %v242, %v316
      %318 = vdwg.mxu0
      %319 = vmatpush.msra.mxu0 0.0
      %320 = vmatpush.msra.mxu0 0.0
      %321 = vmatpush.msra.mxu0 0.0
      %322 = vmatpush.msra.mxu0 0.0
      %323 = vmatpush.msra.mxu0 0.0
      %324 = vmatpush.msra.mxu0 0.0
      %325 = vmatpush.msra.mxu0 0.0
      %326 = vmatpush.msra.mxu0 0.0
      %327 = vmatpush.msra.mxu0 0.0
      %328 = vmatpush.msra.mxu0 0.0
      %329 = vmatpush.msra.mxu0 0.0
      %330 = vmatpush.msra.mxu0 0.0
      %331 = vmatpush.msra.mxu0 0.0
      %332 = vmatpush.msra.mxu0 0.0
      %333 = vmatpush.msra.mxu0 0.0
      %334 = vmatpush.msra.mxu0 %v277
      %335 = vmatmul.f32.gmra.mxu0 %v271
      %v336 = vpop.f32.mrf.mxu0
      %v337 = vadd.f32 %v262, %v336
      %338 = vdwg.mxu0
      %v339 = vld [vmem:[%s165] sm:$0xff]
      %v340 = vld [vmem:[%s165 + $0x8] sm:$0xf]
      %s341 = scalar_lea.vmem %s1, 16
      %v342 = vld [vmem:[%s341] sm:$0xff]
      %345 = vst [vmem:[#allocation1] ss:$2 sm:$0xff] %v339
      %s346 = scalar_lea.vmem [#allocation1], 16
      %347 = vst [vmem:[%s346] ss:$2 sm:$0xff] %v340
      %v348 = vld.sshfl [vmem:[#allocation1] sm:$0xff pattern:$0x75316420]
      %v349 = vld.sshfl [vmem:[#allocation1 + $0x8] sm:$0xff pattern:$0x75316420]
      %v350 = vld.sshfl [vmem:[#allocation1 + $0x10] sm:$0xff pattern:$0x75316420]
      %351 = vrot.lane.b32.xlu0 %v348, 126
      %v352 = vpop.permute.xlu0 %351
      %353 = vrot.lane.b32.xlu0 %v349, 126
      %v354 = vpop.permute.xlu0 %353
      %355 = vrot.lane.b32.xlu0 %v350, 126
      %v356 = vpop.permute.xlu0 %355
      %vm357 = vcmask 1031168
      %v358 = vsel %vm357, %v352, %v354
      %v359 = vsel %vm357, %v354, %v356
      %v361 = vsel %vm193, %v342, 0
      %v363 = vsel %vm197, %v358, 0
      %v365 = vsel %vm197, %v359, 0
      %v367 = vsel %vm197, %v356, 0
      %369 = vmatpush.msra.mxu0 0.0
      %370 = vmatpush.msra.mxu0 0.0
      %371 = vmatpush.msra.mxu0 0.0
      %372 = vmatpush.msra.mxu0 0.0
      %373 = vmatpush.msra.mxu0 0.0
      %374 = vmatpush.msra.mxu0 0.0
      %375 = vmatpush.msra.mxu0 0.0
      %376 = vmatpush.msra.mxu0 0.0
      %377 = vmatpush.msra.mxu0 0.0
      %378 = vmatpush.msra.mxu0 0.0
      %379 = vmatpush.msra.mxu0 0.0
      %380 = vmatpush.msra.mxu0 0.0
      %381 = vmatpush.msra.mxu0 0.0
      %382 = vmatpush.msra.mxu0 0.0
      %383 = vmatpush.msra.mxu0 0.0
      %384 = vmatpush.msra.mxu0 %v363
      %385 = vmatmul.f32.gmra.mxu0 %v361
      %v386 = vpop.f32.mrf.mxu0
      %v387 = vadd.f32 0.0, %v386
      %388 = vdwg.mxu0
      %389 = vmatpush.msra.mxu0 0.0
      %390 = vmatpush.msra.mxu0 0.0
      %391 = vmatpush.msra.mxu0 0.0
      %392 = vmatpush.msra.mxu0 0.0
      %393 = vmatpush.msra.mxu0 0.0
      %394 = vmatpush.msra.mxu0 0.0
      %395 = vmatpush.msra.mxu0 0.0
      %396 = vmatpush.msra.mxu0 0.0
      %397 = vmatpush.msra.mxu0 0.0
      %398 = vmatpush.msra.mxu0 0.0
      %399 = vmatpush.msra.mxu0 0.0
      %400 = vmatpush.msra.mxu0 0.0
      %401 = vmatpush.msra.mxu0 0.0
      %402 = vmatpush.msra.mxu0 0.0
      %403 = vmatpush.msra.mxu0 0.0
      %404 = vmatpush.msra.mxu0 %v365
      %405 = vmatmul.f32.gmra.mxu0 %v361
      %v406 = vpop.f32.mrf.mxu0
      %v407 = vadd.f32 0.0, %v406
      %408 = vdwg.mxu0
      %409 = vmatpush.msra.mxu0 0.0
      %410 = vmatpush.msra.mxu0 0.0
      %411 = vmatpush.msra.mxu0 0.0
      %412 = vmatpush.msra.mxu0 0.0
      %413 = vmatpush.msra.mxu0 0.0
      %414 = vmatpush.msra.mxu0 0.0
      %415 = vmatpush.msra.mxu0 0.0
      %416 = vmatpush.msra.mxu0 0.0
      %417 = vmatpush.msra.mxu0 0.0
      %418 = vmatpush.msra.mxu0 0.0
      %419 = vmatpush.msra.mxu0 0.0
      %420 = vmatpush.msra.mxu0 0.0
      %421 = vmatpush.msra.mxu0 0.0
      %422 = vmatpush.msra.mxu0 0.0
      %423 = vmatpush.msra.mxu0 0.0
      %424 = vmatpush.msra.mxu0 %v367
      %425 = vmatmul.f32.gmra.mxu0 %v361
      %v426 = vpop.f32.mrf.mxu0
      %v427 = vadd.f32 0.0, %v426
      %428 = vdwg.mxu0
      %v429 = vadd.f32 %v297, %v387
      %v430 = vadd.f32 %v317, %v407
      %v431 = vadd.f32 %v337, %v427
      %v432 = vld [vmem:[%s165] sm:$0xff]
      %v433 = vld [vmem:[%s165 + $0x8] sm:$0xf]
      %s434 = scalar_lea.vmem %s1, 24
      %v435 = vld [vmem:[%s434] sm:$0xff]
      %438 = vst [vmem:[#allocation1] ss:$2 sm:$0xff] %v432
      %s439 = scalar_lea.vmem [#allocation1], 16
      %440 = vst [vmem:[%s439] ss:$2 sm:$0xff] %v433
      %v441 = vld.sshfl [vmem:[#allocation1] sm:$0xff pattern:$0x75316420]
      %v442 = vld.sshfl [vmem:[#allocation1 + $0x8] sm:$0xff pattern:$0x75316420]
      %v443 = vld.sshfl [vmem:[#allocation1 + $0x10] sm:$0xff pattern:$0x75316420]
      %444 = vrot.lane.b32.xlu0 %v441, 110
      %v445 = vpop.permute.xlu0 %444
      %446 = vrot.lane.b32.xlu0 %v442, 110
      %v447 = vpop.permute.xlu0 %446
      %448 = vrot.lane.b32.xlu0 %v443, 110
      %v449 = vpop.permute.xlu0 %448
      %vm450 = vcmask 900096
      %v451 = vsel %vm450, %v445, %v447
      %v452 = vsel %vm450, %v447, %v449
      %v454 = vsel %vm193, %v435, 0
      %v456 = vsel %vm197, %v451, 0
      %v458 = vsel %vm197, %v452, 0
      %v460 = vsel %vm197, %v449, 0
      %462 = vmatpush.msra.mxu0 0.0
      %463 = vmatpush.msra.mxu0 0.0
      %464 = vmatpush.msra.mxu0 0.0
      %465 = vmatpush.msra.mxu0 0.0
      %466 = vmatpush.msra.mxu0 0.0
      %467 = vmatpush.msra.mxu0 0.0
      %468 = vmatpush.msra.mxu0 0.0
      %469 = vmatpush.msra.mxu0 0.0
      %470 = vmatpush.msra.mxu0 0.0
      %471 = vmatpush.msra.mxu0 0.0
      %472 = vmatpush.msra.mxu0 0.0
      %473 = vmatpush.msra.mxu0 0.0
      %474 = vmatpush.msra.mxu0 0.0
      %475 = vmatpush.msra.mxu0 0.0
      %476 = vmatpush.msra.mxu0 0.0
      %477 = vmatpush.msra.mxu0 %v456
      %478 = vmatmul.f32.gmra.mxu0 %v454
      %v479 = vpop.f32.mrf.mxu0
      %v480 = vadd.f32 0.0, %v479
      %481 = vdwg.mxu0
      %482 = vmatpush.msra.mxu0 0.0
      %483 = vmatpush.msra.mxu0 0.0
      %484 = vmatpush.msra.mxu0 0.0
      %485 = vmatpush.msra.mxu0 0.0
      %486 = vmatpush.msra.mxu0 0.0
      %487 = vmatpush.msra.mxu0 0.0
      %488 = vmatpush.msra.mxu0 0.0
      %489 = vmatpush.msra.mxu0 0.0
      %490 = vmatpush.msra.mxu0 0.0
      %491 = vmatpush.msra.mxu0 0.0
      %492 = vmatpush.msra.mxu0 0.0
      %493 = vmatpush.msra.mxu0 0.0
      %494 = vmatpush.msra.mxu0 0.0
      %495 = vmatpush.msra.mxu0 0.0
      %496 = vmatpush.msra.mxu0 0.0
      %497 = vmatpush.msra.mxu0 %v458
      %498 = vmatmul.f32.gmra.mxu0 %v454
      %v499 = vpop.f32.mrf.mxu0
      %v500 = vadd.f32 0.0, %v499
      %501 = vdwg.mxu0
      %502 = vmatpush.msra.mxu0 0.0
      %503 = vmatpush.msra.mxu0 0.0
      %504 = vmatpush.msra.mxu0 0.0
      %505 = vmatpush.msra.mxu0 0.0
      %506 = vmatpush.msra.mxu0 0.0
      %507 = vmatpush.msra.mxu0 0.0
      %508 = vmatpush.msra.mxu0 0.0
      %509 = vmatpush.msra.mxu0 0.0
      %510 = vmatpush.msra.mxu0 0.0
      %511 = vmatpush.msra.mxu0 0.0
      %512 = vmatpush.msra.mxu0 0.0
      %513 = vmatpush.msra.mxu0 0.0
      %514 = vmatpush.msra.mxu0 0.0
      %515 = vmatpush.msra.mxu0 0.0
      %516 = vmatpush.msra.mxu0 0.0
      %517 = vmatpush.msra.mxu0 %v460
      %518 = vmatmul.f32.gmra.mxu0 %v454
      %v519 = vpop.f32.mrf.mxu0
      %v520 = vadd.f32 0.0, %v519
      %521 = vdwg.mxu0
      %v522 = vadd.f32 %v429, %v480
      %v523 = vadd.f32 %v430, %v500
      %v524 = vadd.f32 %v431, %v520
      %v525 = vld [vmem:[%s165] sm:$0xff]
      %v526 = vld [vmem:[%s165 + $0x8] sm:$0xf]
      %s527 = scalar_lea.vmem %s1, 32
      %v528 = vld [vmem:[%s527] sm:$0xff]
      %531 = vst [vmem:[#allocation1] ss:$2 sm:$0xff] %v525
      %s532 = scalar_lea.vmem [#allocation1], 16
      %533 = vst [vmem:[%s532] ss:$2 sm:$0xff] %v526
      %v534 = vld.sshfl [vmem:[#allocation1] sm:$0xff pattern:$0x75316420]
      %v535 = vld.sshfl [vmem:[#allocation1 + $0x8] sm:$0xff pattern:$0x75316420]
      %v536 = vld.sshfl [vmem:[#allocation1 + $0x10] sm:$0xff pattern:$0x75316420]
      %537 = vrot.lane.b32.xlu0 %v534, 109
      %v538 = vpop.permute.xlu0 %537
      %539 = vrot.lane.b32.xlu0 %v535, 109
      %v540 = vpop.permute.xlu0 %539
      %541 = vrot.lane.b32.xlu0 %v536, 109
      %v542 = vpop.permute.xlu0 %541
      %vm543 = vcmask 891904
      %v544 = vsel %vm543, %v538, %v540
      %v545 = vsel %vm543, %v540, %v542
      %v547 = vsel %vm193, %v528, 0
      %v549 = vsel %vm197, %v544, 0
      %v551 = vsel %vm197, %v545, 0
      %v553 = vsel %vm197, %v542, 0
      %555 = vmatpush.msra.mxu0 0.0
      %556 = vmatpush.msra.mxu0 0.0
      %557 = vmatpush.msra.mxu0 0.0
      %558 = vmatpush.msra.mxu0 0.0
      %559 = vmatpush.msra.mxu0 0.0
      %560 = vmatpush.msra.mxu0 0.0
      %561 = vmatpush.msra.mxu0 0.0
      %562 = vmatpush.msra.mxu0 0.0
      %563 = vmatpush.msra.mxu0 0.0
      %564 = vmatpush.msra.mxu0 0.0
      %565 = vmatpush.msra.mxu0 0.0
      %566 = vmatpush.msra.mxu0 0.0
      %567 = vmatpush.msra.mxu0 0.0
      %568 = vmatpush.msra.mxu0 0.0
      %569 = vmatpush.msra.mxu0 0.0
      %570 = vmatpush.msra.mxu0 %v549
      %571 = vmatmul.f32.gmra.mxu0 %v547
      %v572 = vpop.f32.mrf.mxu0
      %v573 = vadd.f32 0.0, %v572
      %574 = vdwg.mxu0
      %575 = vmatpush.msra.mxu0 0.0
      %576 = vmatpush.msra.mxu0 0.0
      %577 = vmatpush.msra.mxu0 0.0
      %578 = vmatpush.msra.mxu0 0.0
      %579 = vmatpush.msra.mxu0 0.0
      %580 = vmatpush.msra.mxu0 0.0
      %581 = vmatpush.msra.mxu0 0.0
      %582 = vmatpush.msra.mxu0 0.0
      %583 = vmatpush.msra.mxu0 0.0
      %584 = vmatpush.msra.mxu0 0.0
      %585 = vmatpush.msra.mxu0 0.0
      %586 = vmatpush.msra.mxu0 0.0
      %587 = vmatpush.msra.mxu0 0.0
      %588 = vmatpush.msra.mxu0 0.0
      %589 = vmatpush.msra.mxu0 0.0
      %590 = vmatpush.msra.mxu0 %v551
      %591 = vmatmul.f32.gmra.mxu0 %v547
      %v592 = vpop.f32.mrf.mxu0
      %v593 = vadd.f32 0.0, %v592
      %594 = vdwg.mxu0
      %595 = vmatpush.msra.mxu0 0.0
      %596 = vmatpush.msra.mxu0 0.0
      %597 = vmatpush.msra.mxu0 0.0
      %598 = vmatpush.msra.mxu0 0.0
      %599 = vmatpush.msra.mxu0 0.0
      %600 = vmatpush.msra.mxu0 0.0
      %601 = vmatpush.msra.mxu0 0.0
      %602 = vmatpush.msra.mxu0 0.0
      %603 = vmatpush.msra.mxu0 0.0
      %604 = vmatpush.msra.mxu0 0.0
      %605 = vmatpush.msra.mxu0 0.0
      %606 = vmatpush.msra.mxu0 0.0
      %607 = vmatpush.msra.mxu0 0.0
      %608 = vmatpush.msra.mxu0 0.0
      %609 = vmatpush.msra.mxu0 0.0
      %610 = vmatpush.msra.mxu0 %v553
      %611 = vmatmul.f32.gmra.mxu0 %v547
      %v612 = vpop.f32.mrf.mxu0
      %v613 = vadd.f32 0.0, %v612
      %614 = vdwg.mxu0
      %v615 = vadd.f32 %v522, %v573
      %v616 = vadd.f32 %v523, %v593
      %v617 = vadd.f32 %v524, %v613
      %v618 = vld [vmem:[%s165] sm:$0xff]
      %v619 = vld [vmem:[%s165 + $0x8] sm:$0xf]
      %s620 = scalar_lea.vmem %s1, 40
      %v621 = vld [vmem:[%s620] sm:$0xff]
      %624 = vst [vmem:[#allocation1] ss:$2 sm:$0xff] %v618
      %s625 = scalar_lea.vmem [#allocation1], 16
      %626 = vst [vmem:[%s625] ss:$2 sm:$0xff] %v619
      %v627 = vld.sshfl [vmem:[#allocation1] sm:$0xff pattern:$0x75316420]
      %v628 = vld.sshfl [vmem:[#allocation1 + $0x8] sm:$0xff pattern:$0x75316420]
      %v629 = vld.sshfl [vmem:[#allocation1 + $0x10] sm:$0xff pattern:$0x75316420]
      %630 = vrot.lane.b32.xlu0 %v627, 108
      %v631 = vpop.permute.xlu0 %630
      %632 = vrot.lane.b32.xlu0 %v628, 108
      %v633 = vpop.permute.xlu0 %632
      %634 = vrot.lane.b32.xlu0 %v629, 108
      %v635 = vpop.permute.xlu0 %634
      %vm636 = vcmask 883712
      %v637 = vsel %vm636, %v631, %v633
      %v638 = vsel %vm636, %v633, %v635
      %v640 = vsel %vm193, %v621, 0
      %v642 = vsel %vm197, %v637, 0
      %v644 = vsel %vm197, %v638, 0
      %v646 = vsel %vm197, %v635, 0
      %648 = vmatpush.msra.mxu0 0.0
      %649 = vmatpush.msra.mxu0 0.0
      %650 = vmatpush.msra.mxu0 0.0
      %651 = vmatpush.msra.mxu0 0.0
      %652 = vmatpush.msra.mxu0 0.0
      %653 = vmatpush.msra.mxu0 0.0
      %654 = vmatpush.msra.mxu0 0.0
      %655 = vmatpush.msra.mxu0 0.0
      %656 = vmatpush.msra.mxu0 0.0
      %657 = vmatpush.msra.mxu0 0.0
      %658 = vmatpush.msra.mxu0 0.0
      %659 = vmatpush.msra.mxu0 0.0
      %660 = vmatpush.msra.mxu0 0.0
      %661 = vmatpush.msra.mxu0 0.0
      %662 = vmatpush.msra.mxu0 0.0
      %663 = vmatpush.msra.mxu0 %v642
      %664 = vmatmul.f32.gmra.mxu0 %v640
      %v665 = vpop.f32.mrf.mxu0
      %v666 = vadd.f32 0.0, %v665
      %667 = vdwg.mxu0
      %668 = vmatpush.msra.mxu0 0.0
      %669 = vmatpush.msra.mxu0 0.0
      %670 = vmatpush.msra.mxu0 0.0
      %671 = vmatpush.msra.mxu0 0.0
      %672 = vmatpush.msra.mxu0 0.0
      %673 = vmatpush.msra.mxu0 0.0
      %674 = vmatpush.msra.mxu0 0.0
      %675 = vmatpush.msra.mxu0 0.0
      %676 = vmatpush.msra.mxu0 0.0
      %677 = vmatpush.msra.mxu0 0.0
      %678 = vmatpush.msra.mxu0 0.0
      %679 = vmatpush.msra.mxu0 0.0
      %680 = vmatpush.msra.mxu0 0.0
      %681 = vmatpush.msra.mxu0 0.0
      %682 = vmatpush.msra.mxu0 0.0
      %683 = vmatpush.msra.mxu0 %v644
      %684 = vmatmul.f32.gmra.mxu0 %v640
      %v685 = vpop.f32.mrf.mxu0
      %v686 = vadd.f32 0.0, %v685
      %687 = vdwg.mxu0
      %688 = vmatpush.msra.mxu0 0.0
      %689 = vmatpush.msra.mxu0 0.0
      %690 = vmatpush.msra.mxu0 0.0
      %691 = vmatpush.msra.mxu0 0.0
      %692 = vmatpush.msra.mxu0 0.0
      %693 = vmatpush.msra.mxu0 0.0
      %694 = vmatpush.msra.mxu0 0.0
      %695 = vmatpush.msra.mxu0 0.0
      %696 = vmatpush.msra.mxu0 0.0
      %697 = vmatpush.msra.mxu0 0.0
      %698 = vmatpush.msra.mxu0 0.0
      %699 = vmatpush.msra.mxu0 0.0
      %700 = vmatpush.msra.mxu0 0.0
      %701 = vmatpush.msra.mxu0 0.0
      %702 = vmatpush.msra.mxu0 0.0
      %703 = vmatpush.msra.mxu0 %v646
      %704 = vmatmul.f32.gmra.mxu0 %v640
      %v705 = vpop.f32.mrf.mxu0
      %v706 = vadd.f32 0.0, %v705
      %707 = vdwg.mxu0
      %v708 = vadd.f32 %v615, %v666
      %v709 = vadd.f32 %v616, %v686
      %v710 = vadd.f32 %v617, %v706
      %v711 = vld [vmem:[%s165] sm:$0xff]
      %v712 = vld [vmem:[%s165 + $0x8] sm:$0xf]
      %s713 = scalar_lea.vmem %s1, 48
      %v714 = vld [vmem:[%s713] sm:$0xff]
      %717 = vst [vmem:[#allocation1] ss:$2 sm:$0xff] %v711
      %s718 = scalar_lea.vmem [#allocation1], 16
      %719 = vst [vmem:[%s718] ss:$2 sm:$0xff] %v712
      %v720 = vld.sshfl [vmem:[#allocation1] sm:$0xff pattern:$0x75316420]
      %v721 = vld.sshfl [vmem:[#allocation1 + $0x8] sm:$0xff pattern:$0x75316420]
      %v722 = vld.sshfl [vmem:[#allocation1 + $0x10] sm:$0xff pattern:$0x75316420]
      %723 = vrot.lane.b32.xlu0 %v720, 92
      %v724 = vpop.permute.xlu0 %723
      %725 = vrot.lane.b32.xlu0 %v721, 92
      %v726 = vpop.permute.xlu0 %725
      %727 = vrot.lane.b32.xlu0 %v722, 92
      %v728 = vpop.permute.xlu0 %727
      %vm729 = vcmask 752640
      %v730 = vsel %vm729, %v724, %v726
      %v731 = vsel %vm729, %v726, %v728
      %v733 = vsel %vm193, %v714, 0
      %v735 = vsel %vm197, %v730, 0
      %v737 = vsel %vm197, %v731, 0
      %v739 = vsel %vm197, %v728, 0
      %741 = vmatpush.msra.mxu0 0.0
      %742 = vmatpush.msra.mxu0 0.0
      %743 = vmatpush.msra.mxu0 0.0
      %744 = vmatpush.msra.mxu0 0.0
      %745 = vmatpush.msra.mxu0 0.0
      %746 = vmatpush.msra.mxu0 0.0
      %747 = vmatpush.msra.mxu0 0.0
      %748 = vmatpush.msra.mxu0 0.0
      %749 = vmatpush.msra.mxu0 0.0
      %750 = vmatpush.msra.mxu0 0.0
      %751 = vmatpush.msra.mxu0 0.0
      %752 = vmatpush.msra.mxu0 0.0
      %753 = vmatpush.msra.mxu0 0.0
      %754 = vmatpush.msra.mxu0 0.0
      %755 = vmatpush.msra.mxu0 0.0
      %756 = vmatpush.msra.mxu0 %v735
      %757 = vmatmul.f32.gmra.mxu0 %v733
      %v758 = vpop.f32.mrf.mxu0
      %v759 = vadd.f32 0.0, %v758
      %760 = vdwg.mxu0
      %761 = vmatpush.msra.mxu0 0.0
      %762 = vmatpush.msra.mxu0 0.0
      %763 = vmatpush.msra.mxu0 0.0
      %764 = vmatpush.msra.mxu0 0.0
      %765 = vmatpush.msra.mxu0 0.0
      %766 = vmatpush.msra.mxu0 0.0
      %767 = vmatpush.msra.mxu0 0.0
      %768 = vmatpush.msra.mxu0 0.0
      %769 = vmatpush.msra.mxu0 0.0
      %770 = vmatpush.msra.mxu0 0.0
      %771 = vmatpush.msra.mxu0 0.0
      %772 = vmatpush.msra.mxu0 0.0
      %773 = vmatpush.msra.mxu0 0.0
      %774 = vmatpush.msra.mxu0 0.0
      %775 = vmatpush.msra.mxu0 0.0
      %776 = vmatpush.msra.mxu0 %v737
      %777 = vmatmul.f32.gmra.mxu0 %v733
      %v778 = vpop.f32.mrf.mxu0
      %v779 = vadd.f32 0.0, %v778
      %780 = vdwg.mxu0
      %781 = vmatpush.msra.mxu0 0.0
      %782 = vmatpush.msra.mxu0 0.0
      %783 = vmatpush.msra.mxu0 0.0
      %784 = vmatpush.msra.mxu0 0.0
      %785 = vmatpush.msra.mxu0 0.0
      %786 = vmatpush.msra.mxu0 0.0
      %787 = vmatpush.msra.mxu0 0.0
      %788 = vmatpush.msra.mxu0 0.0
      %789 = vmatpush.msra.mxu0 0.0
      %790 = vmatpush.msra.mxu0 0.0
      %791 = vmatpush.msra.mxu0 0.0
      %792 = vmatpush.msra.mxu0 0.0
      %793 = vmatpush.msra.mxu0 0.0
      %794 = vmatpush.msra.mxu0 0.0
      %795 = vmatpush.msra.mxu0 0.0
      %796 = vmatpush.msra.mxu0 %v739
      %797 = vmatmul.f32.gmra.mxu0 %v733
      %v798 = vpop.f32.mrf.mxu0
      %v799 = vadd.f32 0.0, %v798
      %800 = vdwg.mxu0
      %v801 = vadd.f32 %v708, %v759
      %v802 = vadd.f32 %v709, %v779
      %v803 = vadd.f32 %v710, %v799
      %v804 = vld [vmem:[%s165] sm:$0xff]
      %v805 = vld [vmem:[%s165 + $0x8] sm:$0xf]
      %s806 = scalar_lea.vmem %s1, 56
      %v807 = vld [vmem:[%s806] sm:$0xff]
      %810 = vst [vmem:[#allocation1] ss:$2 sm:$0xff] %v804
      %s811 = scalar_lea.vmem [#allocation1], 16
      %812 = vst [vmem:[%s811] ss:$2 sm:$0xff] %v805
      %v813 = vld.sshfl [vmem:[#allocation1] sm:$0xff pattern:$0x75316420]
      %v814 = vld.sshfl [vmem:[#allocation1 + $0x8] sm:$0xff pattern:$0x75316420]
      %v815 = vld.sshfl [vmem:[#allocation1 + $0x10] sm:$0xff pattern:$0x75316420]
      %816 = vrot.lane.b32.xlu0 %v813, 91
      %v817 = vpop.permute.xlu0 %816
      %818 = vrot.lane.b32.xlu0 %v814, 91
      %v819 = vpop.permute.xlu0 %818
      %820 = vrot.lane.b32.xlu0 %v815, 91
      %v821 = vpop.permute.xlu0 %820
      %vm822 = vcmask 744448
      %v823 = vsel %vm822, %v817, %v819
      %v824 = vsel %vm822, %v819, %v821
      %v826 = vsel %vm193, %v807, 0
      %v828 = vsel %vm197, %v823, 0
      %v830 = vsel %vm197, %v824, 0
      %v832 = vsel %vm197, %v821, 0
      %834 = vmatpush.msra.mxu0 0.0
      %835 = vmatpush.msra.mxu0 0.0
      %836 = vmatpush.msra.mxu0 0.0
      %837 = vmatpush.msra.mxu0 0.0
      %838 = vmatpush.msra.mxu0 0.0
      %839 = vmatpush.msra.mxu0 0.0
      %840 = vmatpush.msra.mxu0 0.0
      %841 = vmatpush.msra.mxu0 0.0
      %842 = vmatpush.msra.mxu0 0.0
      %843 = vmatpush.msra.mxu0 0.0
      %844 = vmatpush.msra.mxu0 0.0
      %845 = vmatpush.msra.mxu0 0.0
      %846 = vmatpush.msra.mxu0 0.0
      %847 = vmatpush.msra.mxu0 0.0
      %848 = vmatpush.msra.mxu0 0.0
      %849 = vmatpush.msra.mxu0 %v828
      %850 = vmatmul.f32.gmra.mxu0 %v826
      %v851 = vpop.f32.mrf.mxu0
      %v852 = vadd.f32 0.0, %v851
      %853 = vdwg.mxu0
      %854 = vmatpush.msra.mxu0 0.0
      %855 = vmatpush.msra.mxu0 0.0
      %856 = vmatpush.msra.mxu0 0.0
      %857 = vmatpush.msra.mxu0 0.0
      %858 = vmatpush.msra.mxu0 0.0
      %859 = vmatpush.msra.mxu0 0.0
      %860 = vmatpush.msra.mxu0 0.0
      %861 = vmatpush.msra.mxu0 0.0
      %862 = vmatpush.msra.mxu0 0.0
      %863 = vmatpush.msra.mxu0 0.0
      %864 = vmatpush.msra.mxu0 0.0
      %865 = vmatpush.msra.mxu0 0.0
      %866 = vmatpush.msra.mxu0 0.0
      %867 = vmatpush.msra.mxu0 0.0
      %868 = vmatpush.msra.mxu0 0.0
      %869 = vmatpush.msra.mxu0 %v830
      %870 = vmatmul.f32.gmra.mxu0 %v826
      %v871 = vpop.f32.mrf.mxu0
      %v872 = vadd.f32 0.0, %v871
      %873 = vdwg.mxu0
      %874 = vmatpush.msra.mxu0 0.0
      %875 = vmatpush.msra.mxu0 0.0
      %876 = vmatpush.msra.mxu0 0.0
      %877 = vmatpush.msra.mxu0 0.0
      %878 = vmatpush.msra.mxu0 0.0
      %879 = vmatpush.msra.mxu0 0.0
      %880 = vmatpush.msra.mxu0 0.0
      %881 = vmatpush.msra.mxu0 0.0
      %882 = vmatpush.msra.mxu0 0.0
      %883 = vmatpush.msra.mxu0 0.0
      %884 = vmatpush.msra.mxu0 0.0
      %885 = vmatpush.msra.mxu0 0.0
      %886 = vmatpush.msra.mxu0 0.0
      %887 = vmatpush.msra.mxu0 0.0
      %888 = vmatpush.msra.mxu0 0.0
      %889 = vmatpush.msra.mxu0 %v832
      %890 = vmatmul.f32.gmra.mxu0 %v826
      %v891 = vpop.f32.mrf.mxu0
      %v892 = vadd.f32 0.0, %v891
      %893 = vdwg.mxu0
      %v894 = vadd.f32 %v801, %v852
      %v895 = vadd.f32 %v802, %v872
      %v896 = vadd.f32 %v803, %v892
      %v897 = vld [vmem:[%s165] sm:$0xff]
      %v898 = vld [vmem:[%s165 + $0x8] sm:$0xf]
      %s899 = scalar_lea.vmem %s1, 64
      %v900 = vld [vmem:[%s899] sm:$0xff]
      %903 = vst [vmem:[#allocation1] ss:$2 sm:$0xff] %v897
      %s904 = scalar_lea.vmem [#allocation1], 16
      %905 = vst [vmem:[%s904] ss:$2 sm:$0xff] %v898
      %v906 = vld.sshfl [vmem:[#allocation1] sm:$0xff pattern:$0x75316420]
      %v907 = vld.sshfl [vmem:[#allocation1 + $0x8] sm:$0xff pattern:$0x75316420]
      %v908 = vld.sshfl [vmem:[#allocation1 + $0x10] sm:$0xff pattern:$0x75316420]
      %909 = vrot.lane.b32.xlu0 %v906, 90
      %v910 = vpop.permute.xlu0 %909
      %911 = vrot.lane.b32.xlu0 %v907, 90
      %v912 = vpop.permute.xlu0 %911
      %913 = vrot.lane.b32.xlu0 %v908, 90
      %v914 = vpop.permute.xlu0 %913
      %vm915 = vcmask 736256
      %v916 = vsel %vm915, %v910, %v912
      %v917 = vsel %vm915, %v912, %v914
      %v919 = vsel %vm193, %v900, 0
      %v921 = vsel %vm197, %v916, 0
      %v923 = vsel %vm197, %v917, 0
      %v925 = vsel %vm197, %v914, 0
      %927 = vmatpush.msra.mxu0 0.0
      %928 = vmatpush.msra.mxu0 0.0
      %929 = vmatpush.msra.mxu0 0.0
      %930 = vmatpush.msra.mxu0 0.0
      %931 = vmatpush.msra.mxu0 0.0
      %932 = vmatpush.msra.mxu0 0.0
      %933 = vmatpush.msra.mxu0 0.0
      %934 = vmatpush.msra.mxu0 0.0
      %935 = vmatpush.msra.mxu0 0.0
      %936 = vmatpush.msra.mxu0 0.0
      %937 = vmatpush.msra.mxu0 0.0
      %938 = vmatpush.msra.mxu0 0.0
      %939 = vmatpush.msra.mxu0 0.0
      %940 = vmatpush.msra.mxu0 0.0
      %941 = vmatpush.msra.mxu0 0.0
      %942 = vmatpush.msra.mxu0 %v921
      %943 = vmatmul.f32.gmra.mxu0 %v919
      %v944 = vpop.f32.mrf.mxu0
      %v945 = vadd.f32 0.0, %v944
      %946 = vdwg.mxu0
      %947 = vmatpush.msra.mxu0 0.0
      %948 = vmatpush.msra.mxu0 0.0
      %949 = vmatpush.msra.mxu0 0.0
      %950 = vmatpush.msra.mxu0 0.0
      %951 = vmatpush.msra.mxu0 0.0
      %952 = vmatpush.msra.mxu0 0.0
      %953 = vmatpush.msra.mxu0 0.0
      %954 = vmatpush.msra.mxu0 0.0
      %955 = vmatpush.msra.mxu0 0.0
      %956 = vmatpush.msra.mxu0 0.0
      %957 = vmatpush.msra.mxu0 0.0
      %958 = vmatpush.msra.mxu0 0.0
      %959 = vmatpush.msra.mxu0 0.0
      %960 = vmatpush.msra.mxu0 0.0
      %961 = vmatpush.msra.mxu0 0.0
      %962 = vmatpush.msra.mxu0 %v923
      %963 = vmatmul.f32.gmra.mxu0 %v919
      %v964 = vpop.f32.mrf.mxu0
      %v965 = vadd.f32 0.0, %v964
      %966 = vdwg.mxu0
      %967 = vmatpush.msra.mxu0 0.0
      %968 = vmatpush.msra.mxu0 0.0
      %969 = vmatpush.msra.mxu0 0.0
      %970 = vmatpush.msra.mxu0 0.0
      %971 = vmatpush.msra.mxu0 0.0
      %972 = vmatpush.msra.mxu0 0.0
      %973 = vmatpush.msra.mxu0 0.0
      %974 = vmatpush.msra.mxu0 0.0
      %975 = vmatpush.msra.mxu0 0.0
      %976 = vmatpush.msra.mxu0 0.0
      %977 = vmatpush.msra.mxu0 0.0
      %978 = vmatpush.msra.mxu0 0.0
      %979 = vmatpush.msra.mxu0 0.0
      %980 = vmatpush.msra.mxu0 0.0
      %981 = vmatpush.msra.mxu0 0.0
      %982 = vmatpush.msra.mxu0 %v925
      %983 = vmatmul.f32.gmra.mxu0 %v919
      %v984 = vpop.f32.mrf.mxu0
      %v985 = vadd.f32 0.0, %v984
      %986 = vdwg.mxu0
      %v987 = vadd.f32 %v894, %v945
      %v988 = vadd.f32 %v895, %v965
      %v989 = vadd.f32 %v896, %v985
      %v990 = vld [vmem:[%s2] sm:$0xff]
      %992 = vset.pattern.permute.xlu0 0
      %993 = vperm.xlu0 %992, %v990
      %v994 = vpop.permute.xlu0 %993
      %v996 = vadd.f32 %v987, %v994
      %v997 = vadd.f32 %v988, %v994
      %v998 = vadd.f32 %v989, %v994
      %v999 = vmax.f32 %v996, 0.0
      %v1000 = vmax.f32 %v997, 0.0
      %v1001 = vmax.f32 %v998, 0.0
      %v1002 = vmul.f32 %v999, 0.0078125
      %v1003 = vmul.f32 %v1000, 0.0078125
      %v1004 = vmul.f32 %v1001, 0.0078125
      %v1005 = vadd.f32 %v1002, 0.5
      %v1006 = vadd.f32 %v1003, 0.5
      %v1007 = vadd.f32 %v1004, 0.5
      %v1008 = vfloor.f32 %v1005
      %v1009 = vfloor.f32 %v1006
      %v1010 = vfloor.f32 %v1007
      %v1011 = vmin.f32 %v1008, 127.0
      %v1012 = vmin.f32 %v1009, 127.0
      %v1013 = vmin.f32 %v1010, 127.0
      %1014 = vst [vmem:[%s170] sm:$0xff] %v1011
      %1015 = vst [vmem:[%s170 + $0x8] sm:$0xff] %v1012
      %vm1016 = vcmask 261120
      %1017 = vst.msk [vmem:[%s170 + $0x10] sm:$0xff] %vm1016, %v1013
      %p1018 = scmp.lt.s32.totalorder %s14, 1
      %s1019 = scalar_select %p1018, %s14, 1
      %s1020 = smul.addr %s1019, 3
      %s1021 = smul.addr %s1020, 8
      %s1022 = scalar_lea.vmem %s3, %s1021
      // Predicated region
      $region33: #{ai85_conv2d_relu.1} parent=31 // pred_check
        %p1023 = pneg %p100
      $region34: #{ai85_conv2d_relu.1} parent=31 // pred_check_branch
        %1025 = sbr.rel (%p1023) target = $region36
      $region35: #{ai85_conv2d_relu.1} parent=31 // pred_region
        _
      $region36: #{ai85_conv2d_relu.1} parent=31 // pred_fallthru
        _
    $region32: #{ai85_conv2d_relu.1} parent=5 // pred_fallthru
      _
    %p1026 = scmp.le.s32.totalorder 2, %s9
    // Predicated region
    $region37: #{ai85_conv2d_relu.1} parent=5 // pred_check
      %p1027 = pneg %p1026
    $region38: #{ai85_conv2d_relu.1} parent=5 // pred_check_branch
      %1029 = sbr.rel (%p1027) target = $region40
    $region39: #{ai85_conv2d_relu.1} parent=5 // pred_region
      %s1030 = ssub.s32 %s9, 2
      // Predicated region
      $region41: #{ai85_conv2d_relu.1} parent=39 // pred_check
        %p1031 = pneg %p106
      $region42: #{ai85_conv2d_relu.1} parent=39 // pred_check_branch
        %1033 = sbr.rel (%p1031) target = $region44
      $region43: #{ai85_conv2d_relu.1} parent=39 // pred_region
        %p1034 = scmp.lt.s32.totalorder %s15, 1
        %s1035 = scalar_select %p1034, %s15, 1
        %s1036 = smul.addr %s1035, 3
        %s1037 = smul.addr %s1036, 8
        %s1038 = scalar_lea.vmem %s3, %s1037
      $region44: #{ai85_conv2d_relu.1} parent=39 // pred_fallthru
        _
    $region40: #{ai85_conv2d_relu.1} parent=5 // pred_fallthru
      _
  $region6: #{ai85_conv2d_relu.1} parent=0 // loop_footer
    %s13 = sadd.s32 1, %s9
  $region7: #{ai85_conv2d_relu.1} parent=0 // loop_footer_branch
    %8 = sbr.rel target = $region3
  $region8: #{ai85_conv2d_relu.1} parent=0 // loop_exit
    _

</llo_original>
